<compile_context>
chip_gen: v7x
topology: tpu7x:2x2x1
jax: 0.10.0
libtpu: 0.0.40
codegen_flags: <defaults>
</compile_context>

<pallas_src>
import functools

import jax
import jax.numpy as jnp
from jax import lax
from jax.experimental import pallas as pl
from jax.experimental.pallas import tpu as pltpu

GROUPS = 32          # se_resnext50_32x4d cardinality
BN_EPS = 1e-5
LEAKY_SLOPE = 0.01   # nn.LeakyReLU() default


def _rup(x, m):
    return -(-x // m) * m


def _pick_tile(dim, unit, cap):
    """Pick (tile, padded_dim): tile is a multiple of `unit`, <= cap, dividing padded_dim."""
    d = _rup(dim, unit)
    if d <= cap:
        return d, d
    for t in range(cap, unit - 1, -unit):
        if d % t == 0:
            return t, d
    return cap, _rup(d, cap)


def _stable_sigmoid(y):
    e = jnp.exp(-jnp.abs(y))
    return jnp.where(y >= 0.0, 1.0 / (1.0 + e), e / (1.0 + e))


# ------------------- fused (batched) matmul + scale/shift + activation -------------------

def _fused_mm_kernel(a_ref, b_ref, s_ref, t_ref, o_ref, acc_ref, *, act):
    @pl.when(pl.program_id(3) == 0)
    def _():
        acc_ref[...] = jnp.zeros_like(acc_ref)

    acc_ref[...] += jnp.dot(a_ref[0], b_ref[0], preferred_element_type=jnp.float32)

    @pl.when(pl.program_id(3) == pl.num_programs(3) - 1)
    def _():
        y = acc_ref[...] * s_ref[0] + t_ref[0]
        if act == "relu":
            y = jnp.maximum(y, 0.0)
        elif act == "leaky_relu":
            y = jnp.where(y >= 0.0, y, LEAKY_SLOPE * y)
        elif act == "sigmoid":
            y = _stable_sigmoid(y)
        o_ref[...] = y.astype(o_ref.dtype)[None]


@functools.partial(jax.jit, static_argnames=("act", "out_dtype"))
def batched_fused_matmul(a, b, scale, shift, *, act="none", out_dtype=jnp.bfloat16):
    """act((a @ b) * scale + shift) per batch.  a:(B,M,K) b:(B,K,N) scale/shift:(B,N).

    bf16 MXU operands, f32 accumulation, epilogue fused into the K-finalize store.
    """
    B, M, K = a.shape
    _, _, N = b.shape
    tm, Mp = _pick_tile(M, 16, 256)
    tn, Np = _pick_tile(N, 128, 512)
    tk, Kp = _pick_tile(K, 128, 512)
    a_p = jnp.pad(a.astype(jnp.bfloat16), ((0, 0), (0, Mp - M), (0, Kp - K)))
    b_p = jnp.pad(b.astype(jnp.bfloat16), ((0, 0), (0, Kp - K), (0, Np - N)))
    s_p = jnp.pad(scale.astype(jnp.float32), ((0, 0), (0, Np - N)))[:, None, :]
    t_p = jnp.pad(shift.astype(jnp.float32), ((0, 0), (0, Np - N)))[:, None, :]
    out = pl.pallas_call(
        functools.partial(_fused_mm_kernel, act=act),
        out_shape=jax.ShapeDtypeStruct((B, Mp, Np), out_dtype),
        grid_spec=pltpu.PrefetchScalarGridSpec(
            num_scalar_prefetch=0,
            grid=(B, Mp // tm, Np // tn, Kp // tk),
            in_specs=[
                pl.BlockSpec((1, tm, tk), lambda bz, i, j, k: (bz, i, k)),
                pl.BlockSpec((1, tk, tn), lambda bz, i, j, k: (bz, k, j)),
                pl.BlockSpec((1, 1, tn), lambda bz, i, j, k: (bz, 0, j)),
                pl.BlockSpec((1, 1, tn), lambda bz, i, j, k: (bz, 0, j)),
            ],
            out_specs=pl.BlockSpec((1, tm, tn), lambda bz, i, j, k: (bz, i, j)),
            scratch_shapes=[pltpu.VMEM((tm, tn), jnp.float32)]),
        compiler_params=pltpu.CompilerParams(
            dimension_semantics=("parallel", "parallel", "parallel", "arbitrary")),
    )(a_p, b_p, s_p, t_p)
    return out[:, :M, :N]


def matmul_bias_act(a, b, scale, shift, *, act="none", out_dtype=jnp.bfloat16):
    """2-D convenience wrapper: act((a @ b) * scale + shift)."""
    return batched_fused_matmul(a[None], b[None], scale[None], shift[None],
                                act=act, out_dtype=out_dtype)[0]


# ------------------------- fused SE excitation (fc1->relu->fc2->sigmoid) -----------------

def _se_excite_kernel(p_ref, w1_ref, b1_ref, w2_ref, b2_ref, o_ref):
    h = jnp.dot(p_ref[...], w1_ref[...], preferred_element_type=jnp.float32) + b1_ref[...]
    h = jnp.maximum(h, 0.0)
    s = jnp.dot(h.astype(w2_ref.dtype), w2_ref[...],
                preferred_element_type=jnp.float32) + b2_ref[...]
    o_ref[...] = _stable_sigmoid(s).astype(o_ref.dtype)


@jax.jit
def se_excite(pooled, fc1_w, fc1_b, fc2_w, fc2_b):
    """sigmoid(relu(pooled @ fc1_w.T + fc1_b) @ fc2_w.T + fc2_b) in one Pallas kernel."""
    N, C = pooled.shape
    Hd = fc1_w.shape[0]
    Np, Cp, Hp = _rup(N, 16), _rup(C, 128), _rup(Hd, 128)
    p = jnp.pad(pooled.astype(jnp.bfloat16), ((0, Np - N), (0, Cp - C)))
    w1 = jnp.pad(fc1_w.T.astype(jnp.bfloat16), ((0, Cp - C), (0, Hp - Hd)))
    b1 = jnp.pad(fc1_b.astype(jnp.float32), (0, Hp - Hd))[None, :]
    w2 = jnp.pad(fc2_w.T.astype(jnp.bfloat16), ((0, Hp - Hd), (0, Cp - C)))
    b2 = jnp.pad(fc2_b.astype(jnp.float32), (0, Cp - C))[None, :]
    out = pl.pallas_call(
        _se_excite_kernel,
        out_shape=jax.ShapeDtypeStruct((Np, Cp), jnp.bfloat16),
        grid_spec=pltpu.PrefetchScalarGridSpec(
            num_scalar_prefetch=0,
            grid=(1,),
            in_specs=[pl.BlockSpec((Np, Cp), lambda i: (0, 0)),
                      pl.BlockSpec((Cp, Hp), lambda i: (0, 0)),
                      pl.BlockSpec((1, Hp), lambda i: (0, 0)),
                      pl.BlockSpec((Hp, Cp), lambda i: (0, 0)),
                      pl.BlockSpec((1, Cp), lambda i: (0, 0))],
            out_specs=pl.BlockSpec((Np, Cp), lambda i: (0, 0))),
    )(p, w1, b1, w2, b2)
    return out[:N, :C]


# ------------------- fused SE rescale + residual add + ReLU ------------------------------

def _se_res_relu_kernel(x_ref, se_ref, r_ref, o_ref):
    y = (x_ref[0].astype(jnp.float32) * se_ref[0].astype(jnp.float32)
         + r_ref[0].astype(jnp.float32))
    o_ref[...] = jnp.maximum(y, 0.0).astype(o_ref.dtype)[None]


@jax.jit
def se_scale_residual_relu(x, se, res):
    """relu(x * se[:, None, :] + res) on (N, HW, C); SE gate broadcast inside the kernel."""
    N, HW, C = x.shape
    tm, HWp = _pick_tile(HW, 16, 256)
    Cp = _rup(C, 128)
    x_p = jnp.pad(x.astype(jnp.bfloat16), ((0, 0), (0, HWp - HW), (0, Cp - C)))
    r_p = jnp.pad(res.astype(jnp.bfloat16), ((0, 0), (0, HWp - HW), (0, Cp - C)))
    se_p = jnp.pad(se.astype(jnp.bfloat16), ((0, 0), (0, Cp - C)))[:, None, :]
    out = pl.pallas_call(
        _se_res_relu_kernel,
        out_shape=jax.ShapeDtypeStruct((N, HWp, Cp), jnp.bfloat16),
        grid_spec=pltpu.PrefetchScalarGridSpec(
            num_scalar_prefetch=0,
            grid=(N, HWp // tm),
            in_specs=[pl.BlockSpec((1, tm, Cp), lambda n, i: (n, i, 0)),
                      pl.BlockSpec((1, 1, Cp), lambda n, i: (n, 0, 0)),
                      pl.BlockSpec((1, tm, Cp), lambda n, i: (n, i, 0))],
            out_specs=pl.BlockSpec((1, tm, Cp), lambda n, i: (n, i, 0))),
        compiler_params=pltpu.CompilerParams(
            dimension_semantics=("parallel", "parallel")),
    )(x_p, se_p, r_p)
    return out[:, :HW, :C]


# --------------------------- conv / pool glue (JAX) --------------------------------------

def _im2col(x_nhwc, kh, kw, stride, pad):
    N, H, W, _ = x_nhwc.shape
    OH = (H + 2 * pad - kh) // stride + 1
    OW = (W + 2 * pad - kw) // stride + 1
    xp = jnp.pad(x_nhwc, ((0, 0), (pad, pad), (pad, pad), (0, 0)))
    cols = [xp[:, i:i + stride * (OH - 1) + 1:stride,
               j:j + stride * (OW - 1) + 1:stride, :]
            for i in range(kh) for j in range(kw)]
    return jnp.stack(cols, axis=-2), OH, OW        # (N, OH, OW, kh*kw, Cin), bf16


def conv2d_fused(x_nhwc, w_oihw, scale, shift, *, stride=1, pad=0, act="none"):
    """conv + per-channel scale/shift + activation in one fused Pallas matmul.
    Returns ((N*OH*OW, Cout) bf16, (N, OH, OW, Cout))."""
    N, H, W, Cin = x_nhwc.shape
    Cout, _, kh, kw = w_oihw.shape
    if kh == 1 and kw == 1 and pad == 0:
        OH = (H - 1) // stride + 1
        OW = (W - 1) // stride + 1
        a = x_nhwc[:, ::stride, ::stride, :].reshape(N * OH * OW, Cin)
    else:
        patches, OH, OW = _im2col(x_nhwc, kh, kw, stride, pad)
        a = patches.reshape(N * OH * OW, kh * kw * Cin)
    b = jnp.transpose(w_oihw, (2, 3, 1, 0)).reshape(kh * kw * Cin, Cout)
    out = matmul_bias_act(a, b, scale, shift, act=act)
    return out, (N, OH, OW, Cout)


def grouped_conv2d_fused(x_nhwc, w_oihw, scale, shift, *, stride, pad, groups, act="relu"):
    """Grouped conv: 128//Cout_g groups packed per grid step with a block-diagonal RHS so
    the MXU output tile is a dense 128 lanes; BN+ReLU epilogue fused into the matmul."""
    N, H, W, Cin = x_nhwc.shape
    Cout, Cin_g, kh, kw = w_oihw.shape
    Cout_g = Cout // groups
    if Cout_g <= 128 and 128 % Cout_g == 0 and groups % (128 // Cout_g) == 0:
        g_pack = 128 // Cout_g
    else:
        g_pack = 1
    n_packs = groups // g_pack
    kg = kh * kw * Cin_g

    patches, OH, OW = _im2col(x_nhwc, kh, kw, stride, pad)       # (N,OH,OW,kh*kw,Cin)
    M = N * OH * OW
    a = patches.reshape(M, kh * kw, n_packs, g_pack, Cin_g)
    a = jnp.transpose(a, (2, 0, 3, 1, 4)).reshape(n_packs, M, g_pack * kg)

    wg = jnp.transpose(w_oihw.reshape(groups, Cout_g, Cin_g, kh, kw),
                       (0, 3, 4, 2, 1)).reshape(n_packs, g_pack, kg, Cout_g)
    eye = jnp.eye(g_pack, dtype=wg.dtype)
    b = jnp.einsum("pgkc,gh->pgkhc", wg, eye).reshape(
        n_packs, g_pack * kg, g_pack * Cout_g)                   # block-diagonal per pack

    s = scale.reshape(n_packs, g_pack * Cout_g)
    t = shift.reshape(n_packs, g_pack * Cout_g)
    out = batched_fused_matmul(a, b, s, t, act=act)              # (packs, M, 128)
    out = jnp.transpose(out, (1, 0, 2)).reshape(M, Cout)
    return out, (N, OH, OW, Cout)


def maxpool2d_ceil(x_nhwc, k=3, stride=2):
    # nn.MaxPool2d(3, stride=2, ceil_mode=True) via reduce_window (no 9x stacked copy).
    N, H, W, C = x_nhwc.shape
    OH = -(-(H - k) // stride) + 1
    OW = -(-(W - k) // stride) + 1
    ph = (OH - 1) * stride + k - H
    pw = (OW - 1) * stride + k - W
    return lax.reduce_window(
        x_nhwc, jnp.array(-jnp.inf, x_nhwc.dtype), lax.max,
        window_dimensions=(1, k, k, 1), window_strides=(1, stride, stride, 1),
        padding=((0, 0), (0, ph), (0, pw), (0, 0)))


def bn_fold(bn):
    s = bn["gamma"] / jnp.sqrt(bn["var"] + BN_EPS)
    return s, bn["beta"] - bn["mean"] * s


def linear_bn_fold(bias, bn):
    s = bn["gamma"] / jnp.sqrt(bn["var"] + BN_EPS)
    return s, (bias - bn["mean"]) * s + bn["beta"]


# ------------------------------ SE-ResNeXt blocks -----------------------------------------

def se_resnext_bottleneck(x_flat, shp, blk):
    N, H, W, Cin = shp
    x4 = x_flat.reshape(N, H, W, Cin)

    out, s1 = conv2d_fused(x4, blk["conv1_w"], *bn_fold(blk["bn1"]),
                           stride=1, pad=0, act="relu")
    out, s2 = grouped_conv2d_fused(out.reshape(s1), blk["conv2_w"], *bn_fold(blk["bn2"]),
                                   stride=blk["stride"], pad=1, groups=GROUPS, act="relu")
    out, s3 = conv2d_fused(out.reshape(s2), blk["conv3_w"], *bn_fold(blk["bn3"]),
                           stride=1, pad=0, act="none")

    n, oh, ow, cb = s3
    x3 = out.reshape(n, oh * ow, cb)
    pooled = jnp.mean(x3.astype(jnp.float32), axis=1)            # SE global avg pool
    se = se_excite(pooled, blk["se_fc1_w"], blk["se_fc1_b"],
                   blk["se_fc2_w"], blk["se_fc2_b"])             # (N, cb) gate

    if "down_w" in blk:
        res, _ = conv2d_fused(x4, blk["down_w"], *bn_fold(blk["down_bn"]),
                              stride=blk["stride"], pad=0, act="none")
    else:
        res = x_flat
    out = se_scale_residual_relu(x3, se, res.reshape(n, oh * ow, cb))
    return out.reshape(n * oh * ow, cb), s3


# ------------------------------- full forward pass ----------------------------------------

def pretrained_cnn_forward(P, x_nchw):
    x = jnp.transpose(x_nchw, (0, 2, 3, 1)).astype(jnp.bfloat16)     # NCHW -> NHWC, bf16

    # conv0: Conv2d(in_ch, 3, k=3, s=1, p=1, bias=True)  (bias fused into matmul epilogue)
    out, shp = conv2d_fused(x, P["conv0_w"], jnp.ones((3,), jnp.float32), P["conv0_b"],
                            stride=1, pad=1, act="none")

    # layer0: 7x7 s2 conv -> BN -> ReLU -> 3x3 s2 maxpool (ceil)
    out, shp = conv2d_fused(out.reshape(shp), P["stem_w"], *bn_fold(P["stem_bn"]),
                            stride=2, pad=3, act="relu")
    x4 = maxpool2d_ceil(out.reshape(shp), k=3, stride=2)
    shp = x4.shape
    out = x4.reshape(-1, shp[-1])

    # layer1..layer4 (3, 4, 6, 3 SEResNeXt bottlenecks)
    for blocks in P["layers"]:
        for blk in blocks:
            out, shp = se_resnext_bottleneck(out, shp, blk)

    # AdaptiveAvgPool2d((1,1)) + squeeze -> (N, 2048)
    n, h, w, c = shp
    feat = jnp.mean(out.reshape(n, h * w, c).astype(jnp.float32), axis=1)

    # block: [Linear -> BatchNorm1d -> LeakyReLU] x3, bias+BN folded into the epilogue
    y = matmul_bias_act(feat, P["lin1_w"].T, *linear_bn_fold(P["lin1_b"], P["bn1d_1"]),
                        act="leaky_relu")
    y = matmul_bias_act(y, P["lin2_w"].T, *linear_bn_fold(P["lin2_b"], P["bn1d_2"]),
                        act="leaky_relu")
    y = matmul_bias_act(y, P["lin3_w"].T, *linear_bn_fold(P["lin3_b"], P["bn1d_3"]),
                        act="leaky_relu")

    # fc_g / fc_v / fc_c merged into one lane-dense matmul, then split
    wh = jnp.concatenate([P["fcg_w"], P["fcv_w"], P["fcc_w"]], axis=0)    # (186, 256)
    bh = jnp.concatenate([P["fcg_b"], P["fcv_b"], P["fcc_b"]], axis=0)
    head = matmul_bias_act(y, wh.T, jnp.ones((186,), jnp.float32), bh,
                           act="none", out_dtype=jnp.float32)
    return head[:, :168], head[:, 168:179], head[:, 179:186]


# ------------------------------ deterministic params --------------------------------------

class _Init:
    def __init__(self, seed=0):
        self._key = jax.random.PRNGKey(seed)
        self._n = 0

    def _next(self):
        self._n += 1
        return jax.random.fold_in(self._key, self._n)

    def conv(self, cout, cin, kh, kw):
        fan_in = cin * kh * kw
        return (jax.random.normal(self._next(), (cout, cin, kh, kw), jnp.float32)
                * (2.0 / fan_in) ** 0.5)

    def linear(self, cout, cin):
        return (jax.random.normal(self._next(), (cout, cin), jnp.float32)
                * (1.0 / cin) ** 0.5)

    def bias(self, m):
        return jax.random.normal(self._next(), (m,), jnp.float32) * 0.02

    def bn(self, m):
        # inference-mode BN stats of a freshly-initialized torch BN in eval()
        return dict(gamma=jnp.ones((m,), jnp.float32), beta=jnp.zeros((m,), jnp.float32),
                    mean=jnp.zeros((m,), jnp.float32), var=jnp.ones((m,), jnp.float32))


def build_params(in_channels=1):
    pi = _Init(0)
    P = dict(conv0_w=pi.conv(3, in_channels, 3, 3), conv0_b=pi.bias(3),
             stem_w=pi.conv(64, 3, 7, 7), stem_bn=pi.bn(64))
    layers = []
    inplanes = 64
    for planes, nblocks, stride0 in ((64, 3, 1), (128, 4, 2), (256, 6, 2), (512, 3, 2)):
        blocks = []
        for bi in range(nblocks):
            stride = stride0 if bi == 0 else 1
            width = planes * 2            # floor(planes * 4 / 64) * 32
            cout = planes * 4
            blk = dict(stride=stride,
                       conv1_w=pi.conv(width, inplanes, 1, 1), bn1=pi.bn(width),
                       conv2_w=pi.conv(width, width // GROUPS, 3, 3), bn2=pi.bn(width),
                       conv3_w=pi.conv(cout, width, 1, 1), bn3=pi.bn(cout),
                       se_fc1_w=pi.linear(cout // 16, cout), se_fc1_b=pi.bias(cout // 16),
                       se_fc2_w=pi.linear(cout, cout // 16), se_fc2_b=pi.bias(cout))
            if stride != 1 or inplanes != cout:
                blk["down_w"] = pi.conv(cout, inplanes, 1, 1)
                blk["down_bn"] = pi.bn(cout)
            blocks.append(blk)
            inplanes = cout
        layers.append(blocks)
    P["layers"] = layers
    P.update(lin1_w=pi.linear(512, 2048), lin1_b=pi.bias(512), bn1d_1=pi.bn(512),
             lin2_w=pi.linear(512, 512), lin2_b=pi.bias(512), bn1d_2=pi.bn(512),
             lin3_w=pi.linear(256, 512), lin3_b=pi.bias(256), bn1d_3=pi.bn(256),
             fcg_w=pi.linear(168, 256), fcg_b=pi.bias(168),
             fcv_w=pi.linear(11, 256), fcv_b=pi.bias(11),
             fcc_w=pi.linear(7, 256), fcc_b=pi.bias(7))
    return P


if __name__ == "__main__":
    params = build_params(in_channels=1)
    x = jax.random.normal(jax.random.PRNGKey(0), (2, 1, 32, 32), jnp.float32)
    g, v, c = pretrained_cnn_forward(params, x)
    jax.block_until_ready((g, v, c))
    assert g.shape == (2, 168) and v.shape == (2, 11) and c.shape == (2, 7)
    assert bool(jnp.all(jnp.isfinite(g)) & jnp.all(jnp.isfinite(v)) & jnp.all(jnp.isfinite(c)))
    print("KERNEL_OK")
</pallas_src>

<mosaic_0001>
module attributes {stable_mosaic.version = 11 : i64} {
  func.func @_fused_mm_kernel(%arg0: i32, %arg1: i32, %arg2: i32, %arg3: i32, %arg4: memref<1x256x128xbf16, #tpu.memory_space<vmem>>, %arg5: memref<1x128x128xbf16, #tpu.memory_space<vmem>>, %arg6: memref<1x1x128xf32, #tpu.memory_space<vmem>>, %arg7: memref<1x1x128xf32, #tpu.memory_space<vmem>>, %arg8: memref<1x256x128xbf16, #tpu.memory_space<vmem>>, %arg9: memref<256x128xf32, #tpu.memory_space<vmem>>) attributes {dimension_semantics = [#tpu.dimension_semantics<parallel>, #tpu.dimension_semantics<parallel>, #tpu.dimension_semantics<parallel>, #tpu.dimension_semantics<arbitrary>], iteration_bounds = array<i64: 1, 8, 1, 1>, scalar_prefetch = 0 : i64, scratch_operands = 1 : i64, tpu.core_type = #tpu.core_type<tc>, window_params = [{transform_indices = @transform_0, window_bounds = array<i64: 1, 256, 128>}, {transform_indices = @transform_1, window_bounds = array<i64: 1, 128, 128>}, {transform_indices = @transform_2, window_bounds = array<i64: 1, 1, 128>}, {transform_indices = @transform_3, window_bounds = array<i64: 1, 1, 128>}, {transform_indices = @transform_4, window_bounds = array<i64: 1, 256, 128>}]} {
    %c0_i32 = arith.constant 0 : i32
    %0 = arith.cmpi eq, %arg3, %c0_i32 : i32
    %1 = arith.extui %0 : i1 to i32
    %c0_i32_0 = arith.constant 0 : i32
    %2 = arith.cmpi ne, %1, %c0_i32_0 : i32
    scf.if %2 {
      %cst_12 = arith.constant 0.000000e+00 : f32
      %14 = vector.broadcast %cst_12 : f32 to vector<256x128xf32>
      %c0_13 = arith.constant 0 : index
      %c0_14 = arith.constant 0 : index
      %15 = vector.load %arg9[%c0_13, %c0_14] : memref<256x128xf32, #tpu.memory_space<vmem>>, vector<256x128xf32>
      tpu.vector_store %arg9[%c0_13, %c0_14], %14 {strides = array<i32>} : memref<256x128xf32, #tpu.memory_space<vmem>>, vector<256x128xf32>,
    } else {
    }
    %c0 = arith.constant 0 : index
    %c0_1 = arith.constant 0 : index
    %3 = vector.load %arg9[%c0, %c0_1] : memref<256x128xf32, #tpu.memory_space<vmem>>, vector<256x128xf32>
    %c0_2 = arith.constant 0 : index
    %c0_3 = arith.constant 0 : index
    %c0_4 = arith.constant 0 : index
    %4 = vector.load %arg4[%c0_2, %c0_3, %c0_4] : memref<1x256x128xbf16, #tpu.memory_space<vmem>>, vector<1x256x128xbf16>
    %5 = vector.shape_cast %4 : vector<1x256x128xbf16> to vector<256x128xbf16>
    %c0_5 = arith.constant 0 : index
    %c0_6 = arith.constant 0 : index
    %c0_7 = arith.constant 0 : index
    %6 = vector.load %arg5[%c0_5, %c0_6, %c0_7] : memref<1x128x128xbf16, #tpu.memory_space<vmem>>, vector<1x128x128xbf16>
    %7 = vector.shape_cast %6 : vector<1x128x128xbf16> to vector<128x128xbf16>
    %cst = arith.constant dense<0.000000e+00> : vector<256x128xf32>
    %8 = tpu.matmul %5, %7, %cst {dimension_numbers = #tpu.dot_dimension_numbers<[1], [0], [0], [1], [0, 0, 1, 1], [], []>} : vector<256x128xbf16>, vector<128x128xbf16>, vector<256x128xf32> -> vector<256x128xf32>
    %9 = arith.addf %3, %8 : vector<256x128xf32>
    %c0_8 = arith.constant 0 : index
    %c0_9 = arith.constant 0 : index
    %10 = vector.load %arg9[%c0_8, %c0_9] : memref<256x128xf32, #tpu.memory_space<vmem>>, vector<256x128xf32>
    tpu.vector_store %arg9[%c0_8, %c0_9], %9 {strides = array<i32>} : memref<256x128xf32, #tpu.memory_space<vmem>>, vector<256x128xf32>,
    %c0_i32_10 = arith.constant 0 : i32
    %11 = arith.cmpi eq, %arg3, %c0_i32_10 : i32
    %12 = arith.extui %11 : i1 to i32
    %c0_i32_11 = arith.constant 0 : i32
    %13 = arith.cmpi ne, %12, %c0_i32_11 : i32
    scf.if %13 {
      %c0_12 = arith.constant 0 : index
      %c0_13 = arith.constant 0 : index
      %14 = vector.load %arg9[%c0_12, %c0_13] : memref<256x128xf32, #tpu.memory_space<vmem>>, vector<256x128xf32>
      %c0_14 = arith.constant 0 : index
      %c0_15 = arith.constant 0 : index
      %c0_16 = arith.constant 0 : index
      %15 = vector.load %arg6[%c0_14, %c0_15, %c0_16] : memref<1x1x128xf32, #tpu.memory_space<vmem>>, vector<1x1x128xf32>
      %16 = vector.shape_cast %15 : vector<1x1x128xf32> to vector<1x128xf32>
      %17 = vector.broadcast %16 : vector<1x128xf32> to vector<256x128xf32>
      %18 = arith.mulf %14, %17 : vector<256x128xf32>
      %c0_17 = arith.constant 0 : index
      %c0_18 = arith.constant 0 : index
      %c0_19 = arith.constant 0 : index
      %19 = vector.load %arg7[%c0_17, %c0_18, %c0_19] : memref<1x1x128xf32, #tpu.memory_space<vmem>>, vector<1x1x128xf32>
      %20 = vector.shape_cast %19 : vector<1x1x128xf32> to vector<1x128xf32>
      %21 = vector.broadcast %20 : vector<1x128xf32> to vector<256x128xf32>
      %22 = arith.addf %18, %21 : vector<256x128xf32>
      %23 = arith.truncf %22 : vector<256x128xf32> to vector<256x128xbf16>
      %24 = vector.shape_cast %23 : vector<256x128xbf16> to vector<1x256x128xbf16>
      %c0_20 = arith.constant 0 : index
      %c0_21 = arith.constant 0 : index
      %c0_22 = arith.constant 0 : index
      %25 = vector.load %arg8[%c0_20, %c0_21, %c0_22] : memref<1x256x128xbf16, #tpu.memory_space<vmem>>, vector<1x256x128xbf16>
      tpu.vector_store %arg8[%c0_20, %c0_21, %c0_22], %24 {strides = array<i32>} : memref<1x256x128xbf16, #tpu.memory_space<vmem>>, vector<1x256x128xbf16>,
    } else {
    }
    return
  }
  func.func @transform_0(%arg0: i32, %arg1: i32, %arg2: i32, %arg3: i32) -> (i32, i32, i32) {
    %c0_i32 = arith.constant 0 : i32
    return %arg0, %arg1, %arg3 : i32, i32, i32
  }
  func.func @transform_1(%arg0: i32, %arg1: i32, %arg2: i32, %arg3: i32) -> (i32, i32, i32) {
    %c0_i32 = arith.constant 0 : i32
    return %arg0, %arg3, %arg2 : i32, i32, i32
  }
  func.func @transform_2(%arg0: i32, %arg1: i32, %arg2: i32, %arg3: i32) -> (i32, i32, i32) {
    %c0_i32 = arith.constant 0 : i32
    %c0_i32_0 = arith.constant 0 : i32
    return %arg0, %c0_i32, %arg2 : i32, i32, i32
  }
  func.func @transform_3(%arg0: i32, %arg1: i32, %arg2: i32, %arg3: i32) -> (i32, i32, i32) {
    %c0_i32 = arith.constant 0 : i32
    %c0_i32_0 = arith.constant 0 : i32
    return %arg0, %c0_i32, %arg2 : i32, i32, i32
  }
  func.func @transform_4(%arg0: i32, %arg1: i32, %arg2: i32, %arg3: i32) -> (i32, i32, i32) {
    %c0_i32 = arith.constant 0 : i32
    return %arg0, %arg1, %arg2 : i32, i32, i32
  }
}

</mosaic_0001>

<llo_original>
// kernel: batched_fused_matmul.1
$region0: #{batched_fused_matmul.1}
  #allocation0 [shape = 'u32[]', space=smem, size = 0x4, offset = 0x4, fixed_abs, tag = 'smem constant byte address 0x4 - core index']
  #allocation1 [shape = 'u32[144,128]{1,0:T(1,128)}', space=vmem, size = 0x12000, scoped, tag = 'internal scratch']
  #allocation2 [shape = 'f32[256,128]{1,0:T(8,128)}', space=vmem, size = 0x20000, scoped, tag = 'scratch operand']
  %s0 = inlined_call_operand.vmem [shape: bf16[1,2048,128], index: 0, kind: input, shape index: {}]
  %s1 = inlined_call_operand.vmem [shape: bf16[1,128,128], index: 1, kind: input, shape index: {}]
  %s2 = inlined_call_operand.vmem [shape: f32[1,1,128], index: 2, kind: input, shape index: {}]
  %s3 = inlined_call_operand.vmem [shape: f32[1,1,128], index: 3, kind: input, shape index: {}]
  %s4 = inlined_call_operand.vmem [shape: bf16[1,2048,128], index: 4, kind: output, shape index: {}]
  %s5 = sld [smem:[#allocation0]]
  $region57: #{batched_fused_matmul.1} parent=0
    _
  %s7 = ssub.s32 1, %s5
  %s8 = scalar_select 0, %s7, %s5
  loop: start=0, step=1, limit=10
  $region2: #{batched_fused_matmul.1} parent=0 // loop_pre_header
    _
  $region3: #{batched_fused_matmul.1} parent=0 // loop_header
    %s10 = sphi 0, %s14
    %p11 = scmp.ge.s32.totalorder %s10, 10
    %s17 = sphi 0, %s43
    %s18 = sphi 0, %s39
    %s19 = sphi 0, %s35
    %s20 = sphi 0, %s31
    %s21 = sphi 0, %s17
    %s22 = sphi 0, %s18
    %s23 = sphi 0, %s19
    %s24 = sphi 0, %s20
    %s25 = sphi 0, %s21
    %s26 = sphi 0, %s22
    %s27 = sphi 0, %s23
    %s28 = sphi 0, %s24
    %s50 = sphi 0, %s52
    %s53 = sphi 0, %s50
    %s54 = sphi 0, %s53
    %s70 = sphi 0, %s54
    %s80 = sphi 0, %s82
    %s83 = sphi 0, %s80
    %s84 = sphi 0, %s83
    %s100 = sphi 0, %s84
    %s108 = sphi 0, %s110
    %s111 = sphi 0, %s108
    %s112 = sphi 0, %s111
    %s128 = sphi 0, %s112
    %s136 = sphi 0, %s138
    %s139 = sphi 0, %s136
    %s140 = sphi 0, %s139
    %s156 = sphi 0, %s140
    %s166 = sphi 0, %s168
    %s169 = sphi 0, %s166
    %s170 = sphi 0, %s169
    %s186 = sphi 0, %s170
  $region4: #{batched_fused_matmul.1} parent=0 // loop_header_branch
    %13 = sbr.rel (%p11) target = $region8
  $region5: #{batched_fused_matmul.1} parent=0 // loop_body
    %s15 = ssub.s32 %s10, 1
    %s16 = ssub.s32 %s10, 2
    %s29 = sadd.s32 1, %s20
    %p30 = scmp.ge.s32.totalorder %s29, 1
    %s31 = scalar_select %p30, 0, %s29
    %s32 = sadd.s32 1, %s19
    %s33 = scalar_select %p30, %s32, %s19
    %p34 = scmp.ge.s32.totalorder %s33, 1
    %s35 = scalar_select %p34, 0, %s33
    %s36 = sadd.s32 1, %s18
    %s37 = scalar_select %p34, %s36, %s18
    %p38 = scmp.ge.s32.totalorder %s37, 8
    %s39 = scalar_select %p38, 0, %s37
    %s40 = sadd.s32 1, %s17
    %s41 = scalar_select %p38, %s40, %s17
    %p42 = scmp.ge.s32.totalorder %s41, 1
    %s43 = scalar_select %p42, 0, %s41
    %s44 = ssub.s32 %s17, %s43
    %s45 = ssub.s32 %s18, %s39
    %s46 = sor.u32 %s44, %s45
    %s47 = ssub.s32 %s20, %s31
    %s48 = sor.u32 %s46, %s47
    %p49 = scmp.eq.s32.totalorder %s48, 0
    %s51 = sadd.s32 %s50, 1
    %s52 = scalar_select %p49, %s50, %s51
    %p55 = pneg %p49
    %p56 = scmp.eq.s32.totalorder %s10, 7
    %p57 = por %p55, %p56
    %p58 = scmp.ne.s32.totalorder %s50, %s53
    %p59 = scmp.eq.s32.totalorder %s10, 0
    %p60 = por %p58, %p59
    %p61 = scmp.ne.s32.totalorder %s50, %s53
    %p62 = scmp.eq.s32.totalorder %s15, 7
    %p63 = por %p61, %p62
    %p64 = scmp.ne.s32.totalorder %s53, %s54
    %p65 = scmp.eq.s32.totalorder %s15, 0
    %p66 = por %p64, %p65
    %p67 = scmp.ne.s32.totalorder %s53, %s54
    %p68 = scmp.eq.s32.totalorder %s16, 7
    %p69 = por %p67, %p68
    %p71 = scmp.ne.s32.totalorder %s54, %s70
    %p72 = scmp.eq.s32.totalorder %s16, 0
    %p73 = por %p71, %p72
    %s74 = ssub.s32 %s17, %s43
    %s75 = ssub.s32 %s20, %s31
    %s76 = sor.u32 %s74, %s75
    %s77 = ssub.s32 %s19, %s35
    %s78 = sor.u32 %s76, %s77
    %p79 = scmp.eq.s32.totalorder %s78, 0
    %s81 = sadd.s32 %s80, 1
    %s82 = scalar_select %p79, %s80, %s81
    %p85 = pneg %p79
    %p86 = scmp.eq.s32.totalorder %s10, 7
    %p87 = por %p85, %p86
    %p88 = scmp.ne.s32.totalorder %s80, %s83
    %p89 = scmp.eq.s32.totalorder %s10, 0
    %p90 = por %p88, %p89
    %p91 = scmp.ne.s32.totalorder %s80, %s83
    %p92 = scmp.eq.s32.totalorder %s15, 7
    %p93 = por %p91, %p92
    %p94 = scmp.ne.s32.totalorder %s83, %s84
    %p95 = scmp.eq.s32.totalorder %s15, 0
    %p96 = por %p94, %p95
    %p97 = scmp.ne.s32.totalorder %s83, %s84
    %p98 = scmp.eq.s32.totalorder %s16, 7
    %p99 = por %p97, %p98
    %p101 = scmp.ne.s32.totalorder %s84, %s100
    %p102 = scmp.eq.s32.totalorder %s16, 0
    %p103 = por %p101, %p102
    %s104 = ssub.s32 %s17, %s43
    %s105 = ssub.s32 %s19, %s35
    %s106 = sor.u32 %s104, %s105
    %p107 = scmp.eq.s32.totalorder %s106, 0
    %s109 = sadd.s32 %s108, 1
    %s110 = scalar_select %p107, %s108, %s109
    %p113 = pneg %p107
    %p114 = scmp.eq.s32.totalorder %s10, 7
    %p115 = por %p113, %p114
    %p116 = scmp.ne.s32.totalorder %s108, %s111
    %p117 = scmp.eq.s32.totalorder %s10, 0
    %p118 = por %p116, %p117
    %p119 = scmp.ne.s32.totalorder %s108, %s111
    %p120 = scmp.eq.s32.totalorder %s15, 7
    %p121 = por %p119, %p120
    %p122 = scmp.ne.s32.totalorder %s111, %s112
    %p123 = scmp.eq.s32.totalorder %s15, 0
    %p124 = por %p122, %p123
    %p125 = scmp.ne.s32.totalorder %s111, %s112
    %p126 = scmp.eq.s32.totalorder %s16, 7
    %p127 = por %p125, %p126
    %p129 = scmp.ne.s32.totalorder %s112, %s128
    %p130 = scmp.eq.s32.totalorder %s16, 0
    %p131 = por %p129, %p130
    %s132 = ssub.s32 %s17, %s43
    %s133 = ssub.s32 %s19, %s35
    %s134 = sor.u32 %s132, %s133
    %p135 = scmp.eq.s32.totalorder %s134, 0
    %s137 = sadd.s32 %s136, 1
    %s138 = scalar_select %p135, %s136, %s137
    %p141 = pneg %p135
    %p142 = scmp.eq.s32.totalorder %s10, 7
    %p143 = por %p141, %p142
    %p144 = scmp.ne.s32.totalorder %s136, %s139
    %p145 = scmp.eq.s32.totalorder %s10, 0
    %p146 = por %p144, %p145
    %p147 = scmp.ne.s32.totalorder %s136, %s139
    %p148 = scmp.eq.s32.totalorder %s15, 7
    %p149 = por %p147, %p148
    %p150 = scmp.ne.s32.totalorder %s139, %s140
    %p151 = scmp.eq.s32.totalorder %s15, 0
    %p152 = por %p150, %p151
    %p153 = scmp.ne.s32.totalorder %s139, %s140
    %p154 = scmp.eq.s32.totalorder %s16, 7
    %p155 = por %p153, %p154
    %p157 = scmp.ne.s32.totalorder %s140, %s156
    %p158 = scmp.eq.s32.totalorder %s16, 0
    %p159 = por %p157, %p158
    %s160 = ssub.s32 %s17, %s43
    %s161 = ssub.s32 %s18, %s39
    %s162 = sor.u32 %s160, %s161
    %s163 = ssub.s32 %s19, %s35
    %s164 = sor.u32 %s162, %s163
    %p165 = scmp.eq.s32.totalorder %s164, 0
    %s167 = sadd.s32 %s166, 1
    %s168 = scalar_select %p165, %s166, %s167
    %p171 = pneg %p165
    %p172 = scmp.eq.s32.totalorder %s10, 7
    %p173 = por %p171, %p172
    %p174 = scmp.ne.s32.totalorder %s166, %s169
    %p175 = scmp.eq.s32.totalorder %s10, 0
    %p176 = por %p174, %p175
    %p177 = scmp.ne.s32.totalorder %s166, %s169
    %p178 = scmp.eq.s32.totalorder %s15, 7
    %p179 = por %p177, %p178
    %p180 = scmp.ne.s32.totalorder %s169, %s170
    %p181 = scmp.eq.s32.totalorder %s15, 0
    %p182 = por %p180, %p181
    %p183 = scmp.ne.s32.totalorder %s169, %s170
    %p184 = scmp.eq.s32.totalorder %s16, 7
    %p185 = por %p183, %p184
    %p187 = scmp.ne.s32.totalorder %s170, %s186
    %p188 = scmp.eq.s32.totalorder %s16, 0
    %p189 = por %p187, %p188
    %p190 = scmp.le.s32.totalorder 1, %s10
    %p191 = scmp.lt.s32.totalorder %s10, 9
    %p192 = pnand %p190, %p191
    %p193 = pneg %p192
    // Predicated region
    $region9: #{batched_fused_matmul.1} parent=5 // pred_check
      _
    $region10: #{batched_fused_matmul.1} parent=5 // pred_check_branch
      %195 = sbr.rel (%p192) target = $region12
    $region11: #{batched_fused_matmul.1} parent=5 // pred_region
      %s196 = ssub.s32 %s10, 1
      // Predicated region
      $region13: #{batched_fused_matmul.1} parent=11 // pred_check
        %p197 = pneg %p96
      $region14: #{batched_fused_matmul.1} parent=11 // pred_check_branch
        %199 = sbr.rel (%p197) target = $region16
      $region15: #{batched_fused_matmul.1} parent=11 // pred_region
        %s200 = smul.u32 16, %s24
        %p201 = scmp.lt.s32.totalorder %s21, 0
        %s202 = scalar_select %p201, %s21, 0
        %p203 = scmp.lt.s32.totalorder %s200, 15
        %s204 = scalar_select %p203, %s200, 15
        %p205 = scmp.lt.s32.totalorder %s23, 0
        %s206 = scalar_select %p205, %s23, 0
        %s207 = sadd.s32 %s206, %s204
        %s208 = smul.addr %s202, 16
        %s209 = sadd.s32 %s207, %s208
        %s210 = smul.addr %s209, 4
        %s211 = scalar_lea.vmem %s1, %s210
        %s212 = smul.u32 16, %s24
      $region16: #{batched_fused_matmul.1} parent=11 // pred_fallthru
        _
      // Predicated region
      $region17: #{batched_fused_matmul.1} parent=11 // pred_check
        %p213 = pneg %p124
      $region18: #{batched_fused_matmul.1} parent=11 // pred_check_branch
        %215 = sbr.rel (%p213) target = $region20
      $region19: #{batched_fused_matmul.1} parent=11 // pred_region
        %p216 = scmp.lt.s32.totalorder %s21, 0
        %s217 = scalar_select %p216, %s21, 0
        %p218 = scmp.lt.s32.totalorder %s23, 0
        %s219 = scalar_select %p218, %s23, 0
        %s220 = sadd.s32 %s219, %s217
        %s221 = scalar_lea.vmem %s2, %s220
      $region20: #{batched_fused_matmul.1} parent=11 // pred_fallthru
        _
      // Predicated region
      $region21: #{batched_fused_matmul.1} parent=11 // pred_check
        %p222 = pneg %p152
      $region22: #{batched_fused_matmul.1} parent=11 // pred_check_branch
        %224 = sbr.rel (%p222) target = $region24
      $region23: #{batched_fused_matmul.1} parent=11 // pred_region
        %p225 = scmp.lt.s32.totalorder %s21, 0
        %s226 = scalar_select %p225, %s21, 0
        %p227 = scmp.lt.s32.totalorder %s23, 0
        %s228 = scalar_select %p227, %s23, 0
        %s229 = sadd.s32 %s228, %s226
        %s230 = scalar_lea.vmem %s3, %s229
      $region24: #{batched_fused_matmul.1} parent=11 // pred_fallthru
        _
    $region12: #{batched_fused_matmul.1} parent=5 // pred_fallthru
      _
    %p231 = scmp.lt.s32.totalorder %s10, 8
    // Predicated region
    $region25: #{batched_fused_matmul.1} parent=5 // pred_check
      %p232 = pneg %p231
    $region26: #{batched_fused_matmul.1} parent=5 // pred_check_branch
      %234 = sbr.rel (%p232) target = $region28
    $region27: #{batched_fused_matmul.1} parent=5 // pred_region
      // Predicated region
      $region29: #{batched_fused_matmul.1} parent=27 // pred_check
        %p235 = pneg %p60
      $region30: #{batched_fused_matmul.1} parent=27 // pred_check_branch
        %237 = sbr.rel (%p235) target = $region32
      $region31: #{batched_fused_matmul.1} parent=27 // pred_region
        %s238 = smul.u32 32, %s18
        %p239 = scmp.lt.s32.totalorder %s17, 0
        %s240 = scalar_select %p239, %s17, 0
        %p241 = scmp.lt.s32.totalorder %s238, 255
        %s242 = scalar_select %p241, %s238, 255
        %p243 = scmp.lt.s32.totalorder %s20, 0
        %s244 = scalar_select %p243, %s20, 0
        %s245 = sadd.s32 %s244, %s242
        %s246 = smul.addr %s240, 256
        %s247 = sadd.s32 %s245, %s246
        %s248 = smul.addr %s247, 4
        %s249 = scalar_lea.vmem %s0, %s248
        %s250 = smul.u32 32, %s18
      $region32: #{batched_fused_matmul.1} parent=27 // pred_fallthru
        _
    $region28: #{batched_fused_matmul.1} parent=5 // pred_fallthru
      _
    %p251 = scmp.le.s32.totalorder 1, %s10
    %p252 = scmp.lt.s32.totalorder %s10, 9
    %p253 = pnand %p251, %p252
    %p254 = pneg %p253
    // Predicated region
    $region33: #{batched_fused_matmul.1} parent=5 // pred_check
      _
    $region34: #{batched_fused_matmul.1} parent=5 // pred_check_branch
      %256 = sbr.rel (%p253) target = $region36
    $region35: #{batched_fused_matmul.1} parent=5 // pred_region
      %s257 = ssub.s32 %s10, 1
      %s258 = smul.u32 32, %s22
      %p259 = scmp.lt.s32.totalorder %s21, 0
      %s260 = scalar_select %p259, %s21, 0
      %p261 = scmp.lt.s32.totalorder %s258, 255
      %s262 = scalar_select %p261, %s258, 255
      %p263 = scmp.lt.s32.totalorder %s24, 0
      %s264 = scalar_select %p263, %s24, 0
      %s265 = sadd.s32 %s264, %s262
      %s266 = smul.addr %s260, 256
      %s267 = sadd.s32 %s265, %s266
      %s268 = smul.addr %s267, 4
      %s269 = scalar_lea.vmem %s0, %s268
      %p270 = pneg %p66
      %p271 = pneg %p63
      %s272 = smul.u32 16, %s24
      %p273 = scmp.lt.s32.totalorder %s21, 0
      %s274 = scalar_select %p273, %s21, 0
      %p275 = scmp.lt.s32.totalorder %s272, 15
      %s276 = scalar_select %p275, %s272, 15
      %p277 = scmp.lt.s32.totalorder %s23, 0
      %s278 = scalar_select %p277, %s23, 0
      %s279 = sadd.s32 %s278, %s276
      %s280 = smul.addr %s274, 16
      %s281 = sadd.s32 %s279, %s280
      %s282 = smul.addr %s281, 4
      %s283 = scalar_lea.vmem %s1, %s282
      %p284 = pneg %p96
      %p285 = pneg %p93
      %p286 = scmp.lt.s32.totalorder %s21, 0
      %s287 = scalar_select %p286, %s21, 0
      %p288 = scmp.lt.s32.totalorder %s23, 0
      %s289 = scalar_select %p288, %s23, 0
      %s290 = sadd.s32 %s289, %s287
      %s291 = scalar_lea.vmem %s2, %s290
      %p292 = pneg %p124
      %p293 = pneg %p121
      %p294 = scmp.lt.s32.totalorder %s21, 0
      %s295 = scalar_select %p294, %s21, 0
      %p296 = scmp.lt.s32.totalorder %s23, 0
      %s297 = scalar_select %p296, %s23, 0
      %s298 = sadd.s32 %s297, %s295
      %s299 = scalar_lea.vmem %s3, %s298
      %p300 = pneg %p152
      %p301 = pneg %p149
      %p302 = pneg %p182
      %p303 = pneg %p179
      %s304 = smul.u32 32, %s22
      %p305 = scmp.lt.s32.totalorder %s21, 0
      %s306 = scalar_select %p305, %s21, 0
      %p307 = scmp.lt.s32.totalorder %s304, 255
      %s308 = scalar_select %p307, %s304, 255
      %p309 = scmp.lt.s32.totalorder %s23, 0
      %s310 = scalar_select %p309, %s23, 0
      %s311 = sadd.s32 %s310, %s308
      %s312 = smul.addr %s306, 256
      %s313 = sadd.s32 %s311, %s312
      %s314 = smul.addr %s313, 4
      %s315 = scalar_lea.vmem %s4, %s314
      %s316 = smul.u32 32, %s22
      %p317 = scmp.lt.s32.totalorder %s21, 0
      %s318 = scalar_select %p317, %s21, 0
      %p319 = scmp.lt.s32.totalorder %s316, 255
      %s320 = scalar_select %p319, %s316, 255
      %p321 = scmp.lt.s32.totalorder %s24, 0
      %s322 = scalar_select %p321, %s24, 0
      %s323 = sadd.s32 %s322, %s320
      %s324 = smul.addr %s318, 256
      %s325 = sadd.s32 %s323, %s324
      %s326 = smul.addr %s325, 4
      %s327 = scalar_lea.vmem %s0, %s326
      %s328 = smul.u32 32, %s22
      %s329 = smul.u32 16, %s24
      %p330 = scmp.lt.s32.totalorder %s21, 0
      %s331 = scalar_select %p330, %s21, 0
      %p332 = scmp.lt.s32.totalorder %s329, 15
      %s333 = scalar_select %p332, %s329, 15
      %p334 = scmp.lt.s32.totalorder %s23, 0
      %s335 = scalar_select %p334, %s23, 0
      %s336 = sadd.s32 %s335, %s333
      %s337 = smul.addr %s331, 16
      %s338 = sadd.s32 %s336, %s337
      %s339 = smul.addr %s338, 4
      %s340 = scalar_lea.vmem %s1, %s339
      %s341 = smul.u32 16, %s24
      %p342 = scmp.lt.s32.totalorder %s21, 0
      %s343 = scalar_select %p342, %s21, 0
      %p344 = scmp.lt.s32.totalorder %s23, 0
      %s345 = scalar_select %p344, %s23, 0
      %s346 = sadd.s32 %s345, %s343
      %s347 = scalar_lea.vmem %s2, %s346
      %p348 = scmp.lt.s32.totalorder %s21, 0
      %s349 = scalar_select %p348, %s21, 0
      %p350 = scmp.lt.s32.totalorder %s23, 0
      %s351 = scalar_select %p350, %s23, 0
      %s352 = sadd.s32 %s351, %s349
      %s353 = scalar_lea.vmem %s3, %s352
      %s354 = smul.u32 32, %s22
      %p355 = scmp.lt.s32.totalorder %s21, 0
      %s356 = scalar_select %p355, %s21, 0
      %p357 = scmp.lt.s32.totalorder %s354, 255
      %s358 = scalar_select %p357, %s354, 255
      %p359 = scmp.lt.s32.totalorder %s23, 0
      %s360 = scalar_select %p359, %s23, 0
      %s361 = sadd.s32 %s360, %s358
      %s362 = smul.addr %s356, 256
      %s363 = sadd.s32 %s361, %s362
      %s364 = smul.addr %s363, 4
      %s365 = scalar_lea.vmem %s4, %s364
      %s366 = smul.u32 32, %s22
      %p368 = scmp.eq.s32.totalorder %s24, 0
      // Predicated region
      $region37: #{batched_fused_matmul.1} parent=35 // pred_check
        %p369 = pneg %p368
      $region38: #{batched_fused_matmul.1} parent=35 // pred_check_branch
        %371 = sbr.rel (%p369) target = $region40
      $region39: #{batched_fused_matmul.1} parent=35 // pred_region
        %372 = vst [vmem:[#allocation2] sm:$0xff] 0.0
        %373 = vst [vmem:[#allocation2 + $0x8] sm:$0xff] 0.0
        %374 = vst [vmem:[#allocation2 + $0x10] sm:$0xff] 0.0
        %375 = vst [vmem:[#allocation2 + $0x18] sm:$0xff] 0.0
        %376 = vst [vmem:[#allocation2 + $0x20] sm:$0xff] 0.0
        %377 = vst [vmem:[#allocation2 + $0x28] sm:$0xff] 0.0
        %378 = vst [vmem:[#allocation2 + $0x30] sm:$0xff] 0.0
        %379 = vst [vmem:[#allocation2 + $0x38] sm:$0xff] 0.0
        %380 = vst [vmem:[#allocation2 + $0x40] sm:$0xff] 0.0
        %381 = vst [vmem:[#allocation2 + $0x48] sm:$0xff] 0.0
        %382 = vst [vmem:[#allocation2 + $0x50] sm:$0xff] 0.0
        %383 = vst [vmem:[#allocation2 + $0x58] sm:$0xff] 0.0
        %384 = vst [vmem:[#allocation2 + $0x60] sm:$0xff] 0.0
        %385 = vst [vmem:[#allocation2 + $0x68] sm:$0xff] 0.0
        %386 = vst [vmem:[#allocation2 + $0x70] sm:$0xff] 0.0
        %387 = vst [vmem:[#allocation2 + $0x78] sm:$0xff] 0.0
        %388 = vst [vmem:[#allocation2 + $0x80] sm:$0xff] 0.0
        %389 = vst [vmem:[#allocation2 + $0x88] sm:$0xff] 0.0
        %390 = vst [vmem:[#allocation2 + $0x90] sm:$0xff] 0.0
        %391 = vst [vmem:[#allocation2 + $0x98] sm:$0xff] 0.0
        %392 = vst [vmem:[#allocation2 + $0xa0] sm:$0xff] 0.0
        %393 = vst [vmem:[#allocation2 + $0xa8] sm:$0xff] 0.0
        %394 = vst [vmem:[#allocation2 + $0xb0] sm:$0xff] 0.0
        %395 = vst [vmem:[#allocation2 + $0xb8] sm:$0xff] 0.0
        %396 = vst [vmem:[#allocation2 + $0xc0] sm:$0xff] 0.0
        %397 = vst [vmem:[#allocation2 + $0xc8] sm:$0xff] 0.0
        %398 = vst [vmem:[#allocation2 + $0xd0] sm:$0xff] 0.0
        %399 = vst [vmem:[#allocation2 + $0xd8] sm:$0xff] 0.0
        %400 = vst [vmem:[#allocation2 + $0xe0] sm:$0xff] 0.0
        %401 = vst [vmem:[#allocation2 + $0xe8] sm:$0xff] 0.0
        %402 = vst [vmem:[#allocation2 + $0xf0] sm:$0xff] 0.0
        %403 = vst [vmem:[#allocation2 + $0xf8] sm:$0xff] 0.0
      $region40: #{batched_fused_matmul.1} parent=35 // pred_fallthru
        _
      %v404 = vld [vmem:[#allocation2] sm:$0xff]
      %v405 = vld [vmem:[#allocation2 + $0x8] sm:$0xff]
      %v406 = vld [vmem:[#allocation2 + $0x10] sm:$0xff]
      %v407 = vld [vmem:[#allocation2 + $0x18] sm:$0xff]
      %v408 = vld [vmem:[#allocation2 + $0x20] sm:$0xff]
      %v409 = vld [vmem:[#allocation2 + $0x28] sm:$0xff]
      %v410 = vld [vmem:[#allocation2 + $0x30] sm:$0xff]
      %v411 = vld [vmem:[#allocation2 + $0x38] sm:$0xff]
      %v412 = vld [vmem:[#allocation2 + $0x40] sm:$0xff]
      %v413 = vld [vmem:[#allocation2 + $0x48] sm:$0xff]
      %v414 = vld [vmem:[#allocation2 + $0x50] sm:$0xff]
      %v415 = vld [vmem:[#allocation2 + $0x58] sm:$0xff]
      %v416 = vld [vmem:[#allocation2 + $0x60] sm:$0xff]
      %v417 = vld [vmem:[#allocation2 + $0x68] sm:$0xff]
      %v418 = vld [vmem:[#allocation2 + $0x70] sm:$0xff]
      %v419 = vld [vmem:[#allocation2 + $0x78] sm:$0xff]
      %v420 = vld [vmem:[#allocation2 + $0x80] sm:$0xff]
      %v421 = vld [vmem:[#allocation2 + $0x88] sm:$0xff]
      %v422 = vld [vmem:[#allocation2 + $0x90] sm:$0xff]
      %v423 = vld [vmem:[#allocation2 + $0x98] sm:$0xff]
      %v424 = vld [vmem:[#allocation2 + $0xa0] sm:$0xff]
      %v425 = vld [vmem:[#allocation2 + $0xa8] sm:$0xff]
      %v426 = vld [vmem:[#allocation2 + $0xb0] sm:$0xff]
      %v427 = vld [vmem:[#allocation2 + $0xb8] sm:$0xff]
      %v428 = vld [vmem:[#allocation2 + $0xc0] sm:$0xff]
      %v429 = vld [vmem:[#allocation2 + $0xc8] sm:$0xff]
      %v430 = vld [vmem:[#allocation2 + $0xd0] sm:$0xff]
      %v431 = vld [vmem:[#allocation2 + $0xd8] sm:$0xff]
      %v432 = vld [vmem:[#allocation2 + $0xe0] sm:$0xff]
      %v433 = vld [vmem:[#allocation2 + $0xe8] sm:$0xff]
      %v434 = vld [vmem:[#allocation2 + $0xf0] sm:$0xff]
      %v435 = vld [vmem:[#allocation2 + $0xf8] sm:$0xff]
      %v436 = vld [vmem:[%s327] sm:$0xf]
      %v437 = vld [vmem:[%s327 + $0x4] sm:$0xf]
      %v438 = vld [vmem:[%s327 + $0x8] sm:$0xf]
      %v439 = vld [vmem:[%s327 + $0xc] sm:$0xf]
      %v440 = vld [vmem:[%s327 + $0x10] sm:$0xf]
      %v441 = vld [vmem:[%s327 + $0x14] sm:$0xf]
      %v442 = vld [vmem:[%s327 + $0x18] sm:$0xf]
      %v443 = vld [vmem:[%s327 + $0x1c] sm:$0xf]
      %v444 = vld [vmem:[%s327 + $0x20] sm:$0xf]
      %v445 = vld [vmem:[%s327 + $0x24] sm:$0xf]
      %v446 = vld [vmem:[%s327 + $0x28] sm:$0xf]
      %v447 = vld [vmem:[%s327 + $0x2c] sm:$0xf]
      %v448 = vld [vmem:[%s327 + $0x30] sm:$0xf]
      %v449 = vld [vmem:[%s327 + $0x34] sm:$0xf]
      %v450 = vld [vmem:[%s327 + $0x38] sm:$0xf]
      %v451 = vld [vmem:[%s327 + $0x3c] sm:$0xf]
      %v452 = vld [vmem:[%s327 + $0x40] sm:$0xf]
      %v453 = vld [vmem:[%s327 + $0x44] sm:$0xf]
      %v454 = vld [vmem:[%s327 + $0x48] sm:$0xf]
      %v455 = vld [vmem:[%s327 + $0x4c] sm:$0xf]
      %v456 = vld [vmem:[%s327 + $0x50] sm:$0xf]
      %v457 = vld [vmem:[%s327 + $0x54] sm:$0xf]
      %v458 = vld [vmem:[%s327 + $0x58] sm:$0xf]
      %v459 = vld [vmem:[%s327 + $0x5c] sm:$0xf]
      %v460 = vld [vmem:[%s327 + $0x60] sm:$0xf]
      %v461 = vld [vmem:[%s327 + $0x64] sm:$0xf]
      %v462 = vld [vmem:[%s327 + $0x68] sm:$0xf]
      %v463 = vld [vmem:[%s327 + $0x6c] sm:$0xf]
      %v464 = vld [vmem:[%s327 + $0x70] sm:$0xf]
      %v465 = vld [vmem:[%s327 + $0x74] sm:$0xf]
      %v466 = vld [vmem:[%s327 + $0x78] sm:$0xf]
      %v467 = vld [vmem:[%s327 + $0x7c] sm:$0xf]
      %v468 = vld [vmem:[%s340] sm:$0xf]
      %v469 = vld [vmem:[%s340 + $0x4] sm:$0xf]
      %v470 = vld [vmem:[%s340 + $0x8] sm:$0xf]
      %v471 = vld [vmem:[%s340 + $0xc] sm:$0xf]
      %v472 = vld [vmem:[%s340 + $0x10] sm:$0xf]
      %v473 = vld [vmem:[%s340 + $0x14] sm:$0xf]
      %v474 = vld [vmem:[%s340 + $0x18] sm:$0xf]
      %v475 = vld [vmem:[%s340 + $0x1c] sm:$0xf]
      %v476 = vld [vmem:[%s340 + $0x20] sm:$0xf]
      %v477 = vld [vmem:[%s340 + $0x24] sm:$0xf]
      %v478 = vld [vmem:[%s340 + $0x28] sm:$0xf]
      %v479 = vld [vmem:[%s340 + $0x2c] sm:$0xf]
      %v480 = vld [vmem:[%s340 + $0x30] sm:$0xf]
      %v481 = vld [vmem:[%s340 + $0x34] sm:$0xf]
      %v482 = vld [vmem:[%s340 + $0x38] sm:$0xf]
      %v483 = vld [vmem:[%s340 + $0x3c] sm:$0xf]
      %v516 = vunpack.c.l.b16 %v436
      %v517 = vunpack.c.l.b16 %v437
      %v518 = vunpack.c.l.b16 %v438
      %v519 = vunpack.c.l.b16 %v439
      %v520 = vunpack.c.l.b16 %v440
      %v521 = vunpack.c.l.b16 %v441
      %v522 = vunpack.c.l.b16 %v442
      %v523 = vunpack.c.l.b16 %v443
      %v524 = vunpack.c.l.b16 %v444
      %v525 = vunpack.c.l.b16 %v445
      %v526 = vunpack.c.l.b16 %v446
      %v527 = vunpack.c.l.b16 %v447
      %v528 = vunpack.c.l.b16 %v448
      %v529 = vunpack.c.l.b16 %v449
      %v530 = vunpack.c.l.b16 %v450
      %v531 = vunpack.c.l.b16 %v451
      %v532 = vunpack.c.l.b16 %v452
      %v533 = vunpack.c.l.b16 %v453
      %v534 = vunpack.c.l.b16 %v454
      %v535 = vunpack.c.l.b16 %v455
      %v536 = vunpack.c.l.b16 %v456
      %v537 = vunpack.c.l.b16 %v457
      %v538 = vunpack.c.l.b16 %v458
      %v539 = vunpack.c.l.b16 %v459
      %v540 = vunpack.c.l.b16 %v460
      %v541 = vunpack.c.l.b16 %v461
      %v542 = vunpack.c.l.b16 %v462
      %v543 = vunpack.c.l.b16 %v463
      %v544 = vunpack.c.l.b16 %v464
      %v545 = vunpack.c.l.b16 %v465
      %v546 = vunpack.c.l.b16 %v466
      %v547 = vunpack.c.l.b16 %v467
      %v548 = vpack.c.b16 %v517, %v516
      %v549 = vpack.c.b16 %v519, %v518
      %v550 = vpack.c.b16 %v521, %v520
      %v551 = vpack.c.b16 %v523, %v522
      %v552 = vpack.c.b16 %v525, %v524
      %v553 = vpack.c.b16 %v527, %v526
      %v554 = vpack.c.b16 %v529, %v528
      %v555 = vpack.c.b16 %v531, %v530
      %v556 = vpack.c.b16 %v533, %v532
      %v557 = vpack.c.b16 %v535, %v534
      %v558 = vpack.c.b16 %v537, %v536
      %v559 = vpack.c.b16 %v539, %v538
      %v560 = vpack.c.b16 %v541, %v540
      %v561 = vpack.c.b16 %v543, %v542
      %v562 = vpack.c.b16 %v545, %v544
      %v563 = vpack.c.b16 %v547, %v546
      %v596 = vunpack.c.l.b16 %v468
      %v597 = vunpack.c.l.b16 %v469
      %v598 = vunpack.c.l.b16 %v470
      %v599 = vunpack.c.l.b16 %v471
      %v600 = vunpack.c.l.b16 %v472
      %v601 = vunpack.c.l.b16 %v473
      %v602 = vunpack.c.l.b16 %v474
      %v603 = vunpack.c.l.b16 %v475
      %v604 = vunpack.c.l.b16 %v476
      %v605 = vunpack.c.l.b16 %v477
      %v606 = vunpack.c.l.b16 %v478
      %v607 = vunpack.c.l.b16 %v479
      %v608 = vunpack.c.l.b16 %v480
      %v609 = vunpack.c.l.b16 %v481
      %v610 = vunpack.c.l.b16 %v482
      %v611 = vunpack.c.l.b16 %v483
      %v612 = vpack.c.b16 %v597, %v596
      %v613 = vpack.c.b16 %v599, %v598
      %v614 = vpack.c.b16 %v601, %v600
      %v615 = vpack.c.b16 %v603, %v602
      %v616 = vpack.c.b16 %v605, %v604
      %v617 = vpack.c.b16 %v607, %v606
      %v618 = vpack.c.b16 %v609, %v608
      %v619 = vpack.c.b16 %v611, %v610
      %628 = vmatprep.subr.bf16.mxu0 0
      %629 = vmatpush1.bf16.msra.mxu0 %v612
      %630 = vmatprep.subr.bf16.mxu0 0
      %631 = vmatpush1.bf16.msra.mxu0 %v613
      %632 = vmatprep.subr.bf16.mxu0 0
      %633 = vmatpush1.bf16.msra.mxu0 %v614
      %634 = vmatprep.subr.bf16.mxu0 0
      %635 = vmatpush1.bf16.msra.mxu0 %v615
      %636 = vmatprep.subr.bf16.mxu0 0
      %637 = vmatpush1.bf16.msra.mxu0 %v616
      %638 = vmatprep.subr.bf16.mxu0 0
      %639 = vmatpush1.bf16.msra.mxu0 %v617
      %640 = vmatprep.subr.bf16.mxu0 0
      %641 = vmatpush1.bf16.msra.mxu0 %v618
      %642 = vmatprep.subr.bf16.mxu0 0
      %643 = vmatpush1.bf16.msra.mxu0 %v619
      %644 = vmatprep.subr.bf16.mxu0 0
      %645 = vmatpush1.bf16.msra.mxu0 0
      %646 = vmatprep.subr.bf16.mxu0 0
      %647 = vmatpush1.bf16.msra.mxu0 0
      %648 = vmatprep.subr.bf16.mxu0 0
      %649 = vmatpush1.bf16.msra.mxu0 0
      %650 = vmatprep.subr.bf16.mxu0 0
      %651 = vmatpush1.bf16.msra.mxu0 0
      %652 = vmatprep.subr.bf16.mxu0 0
      %653 = vmatpush1.bf16.msra.mxu0 0
      %654 = vmatprep.subr.bf16.mxu0 0
      %655 = vmatpush1.bf16.msra.mxu0 0
      %656 = vmatprep.subr.bf16.mxu0 0
      %657 = vmatpush1.bf16.msra.mxu0 0
      %658 = vmatprep.subr.bf16.mxu0 0
      %659 = vmatpush1.bf16.msra.mxu0 0
      %660 = vmatprep.mubr.bf16.mxu0 0
      %661 = vmatmul.mubr.bf16.gmra.mrb[0].mxu0 %v548
      %v662 = vpop.f32.mrb[0].mxu0
      %v663 = vadd.f32 0.0, %v662
      %v664 = vpop.f32.mrb[0].mxu0
      %v665 = vpop.f32.mrb[0].mxu0
      %v666 = vadd.f32 0.0, %v665
      %v667 = vpop.f32.mrb[0].mxu0
      %668 = vmatprep.mubr.bf16.mxu0 0
      %669 = vmatmul.mubr.bf16.gmra.mrb[0].mxu0 %v549
      %v670 = vpop.f32.mrb[0].mxu0
      %v671 = vadd.f32 0.0, %v670
      %v672 = vpop.f32.mrb[0].mxu0
      %v673 = vpop.f32.mrb[0].mxu0
      %v674 = vadd.f32 0.0, %v673
      %v675 = vpop.f32.mrb[0].mxu0
      %676 = vmatprep.mubr.bf16.mxu0 0
      %677 = vmatmul.mubr.bf16.gmra.mrb[0].mxu0 %v550
      %v678 = vpop.f32.mrb[0].mxu0
      %v679 = vadd.f32 0.0, %v678
      %v680 = vpop.f32.mrb[0].mxu0
      %v681 = vpop.f32.mrb[0].mxu0
      %v682 = vadd.f32 0.0, %v681
      %v683 = vpop.f32.mrb[0].mxu0
      %684 = vmatprep.mubr.bf16.mxu0 0
      %685 = vmatmul.mubr.bf16.gmra.mrb[0].mxu0 %v551
      %v686 = vpop.f32.mrb[0].mxu0
      %v687 = vadd.f32 0.0, %v686
      %v688 = vpop.f32.mrb[0].mxu0
      %v689 = vpop.f32.mrb[0].mxu0
      %v690 = vadd.f32 0.0, %v689
      %v691 = vpop.f32.mrb[0].mxu0
      %692 = vmatprep.mubr.bf16.mxu0 0
      %693 = vmatmul.mubr.bf16.gmra.mrb[0].mxu0 %v552
      %v694 = vpop.f32.mrb[0].mxu0
      %v695 = vadd.f32 0.0, %v694
      %v696 = vpop.f32.mrb[0].mxu0
      %v697 = vpop.f32.mrb[0].mxu0
      %v698 = vadd.f32 0.0, %v697
      %v699 = vpop.f32.mrb[0].mxu0
      %700 = vmatprep.mubr.bf16.mxu0 0
      %701 = vmatmul.mubr.bf16.gmra.mrb[0].mxu0 %v553
      %v702 = vpop.f32.mrb[0].mxu0
      %v703 = vadd.f32 0.0, %v702
      %v704 = vpop.f32.mrb[0].mxu0
      %v705 = vpop.f32.mrb[0].mxu0
      %v706 = vadd.f32 0.0, %v705
      %v707 = vpop.f32.mrb[0].mxu0
      %708 = vmatprep.mubr.bf16.mxu0 0
      %709 = vmatmul.mubr.bf16.gmra.mrb[0].mxu0 %v554
      %v710 = vpop.f32.mrb[0].mxu0
      %v711 = vadd.f32 0.0, %v710
      %v712 = vpop.f32.mrb[0].mxu0
      %v713 = vpop.f32.mrb[0].mxu0
      %v714 = vadd.f32 0.0, %v713
      %v715 = vpop.f32.mrb[0].mxu0
      %716 = vmatprep.mubr.bf16.mxu0 0
      %717 = vmatmul.mubr.bf16.gmra.mrb[0].mxu0 %v555
      %v718 = vpop.f32.mrb[0].mxu0
      %v719 = vadd.f32 0.0, %v718
      %v720 = vpop.f32.mrb[0].mxu0
      %v721 = vpop.f32.mrb[0].mxu0
      %v722 = vadd.f32 0.0, %v721
      %v723 = vpop.f32.mrb[0].mxu0
      %724 = vmatprep.mubr.bf16.mxu0 0
      %725 = vmatmul.mubr.bf16.gmra.mrb[0].mxu0 %v556
      %v726 = vpop.f32.mrb[0].mxu0
      %v727 = vadd.f32 0.0, %v726
      %v728 = vpop.f32.mrb[0].mxu0
      %v729 = vpop.f32.mrb[0].mxu0
      %v730 = vadd.f32 0.0, %v729
      %v731 = vpop.f32.mrb[0].mxu0
      %732 = vmatprep.mubr.bf16.mxu0 0
      %733 = vmatmul.mubr.bf16.gmra.mrb[0].mxu0 %v557
      %v734 = vpop.f32.mrb[0].mxu0
      %v735 = vadd.f32 0.0, %v734
      %v736 = vpop.f32.mrb[0].mxu0
      %v737 = vpop.f32.mrb[0].mxu0
      %v738 = vadd.f32 0.0, %v737
      %v739 = vpop.f32.mrb[0].mxu0
      %740 = vmatprep.mubr.bf16.mxu0 0
      %741 = vmatmul.mubr.bf16.gmra.mrb[0].mxu0 %v558
      %v742 = vpop.f32.mrb[0].mxu0
      %v743 = vadd.f32 0.0, %v742
      %v744 = vpop.f32.mrb[0].mxu0
      %v745 = vpop.f32.mrb[0].mxu0
      %v746 = vadd.f32 0.0, %v745
      %v747 = vpop.f32.mrb[0].mxu0
      %748 = vmatprep.mubr.bf16.mxu0 0
      %749 = vmatmul.mubr.bf16.gmra.mrb[0].mxu0 %v559
      %v750 = vpop.f32.mrb[0].mxu0
      %v751 = vadd.f32 0.0, %v750
      %v752 = vpop.f32.mrb[0].mxu0
      %v753 = vpop.f32.mrb[0].mxu0
      %v754 = vadd.f32 0.0, %v753
      %v755 = vpop.f32.mrb[0].mxu0
      %756 = vmatprep.mubr.bf16.mxu0 0
      %757 = vmatmul.mubr.bf16.gmra.mrb[0].mxu0 %v560
      %v758 = vpop.f32.mrb[0].mxu0
      %v759 = vadd.f32 0.0, %v758
      %v760 = vpop.f32.mrb[0].mxu0
      %v761 = vpop.f32.mrb[0].mxu0
      %v762 = vadd.f32 0.0, %v761
      %v763 = vpop.f32.mrb[0].mxu0
      %764 = vmatprep.mubr.bf16.mxu0 0
      %765 = vmatmul.mubr.bf16.gmra.mrb[0].mxu0 %v561
      %v766 = vpop.f32.mrb[0].mxu0
      %v767 = vadd.f32 0.0, %v766
      %v768 = vpop.f32.mrb[0].mxu0
      %v769 = vpop.f32.mrb[0].mxu0
      %v770 = vadd.f32 0.0, %v769
      %v771 = vpop.f32.mrb[0].mxu0
      %772 = vmatprep.mubr.bf16.mxu0 0
      %773 = vmatmul.mubr.bf16.gmra.mrb[0].mxu0 %v562
      %v774 = vpop.f32.mrb[0].mxu0
      %v775 = vadd.f32 0.0, %v774
      %v776 = vpop.f32.mrb[0].mxu0
      %v777 = vpop.f32.mrb[0].mxu0
      %v778 = vadd.f32 0.0, %v777
      %v779 = vpop.f32.mrb[0].mxu0
      %780 = vmatprep.mubr.bf16.mxu0 0
      %781 = vmatmul.mubr.bf16.gmra.mrb[0].mxu0 %v563
      %v782 = vpop.f32.mrb[0].mxu0
      %v783 = vadd.f32 0.0, %v782
      %v784 = vpop.f32.mrb[0].mxu0
      %v785 = vpop.f32.mrb[0].mxu0
      %v786 = vadd.f32 0.0, %v785
      %v787 = vpop.f32.mrb[0].mxu0
      %788 = vdwg.mxu0
      %v789 = vadd.f32 %v404, %v663
      %v790 = vadd.f32 %v405, %v666
      %v791 = vadd.f32 %v406, %v671
      %v792 = vadd.f32 %v407, %v674
      %v793 = vadd.f32 %v408, %v679
      %v794 = vadd.f32 %v409, %v682
      %v795 = vadd.f32 %v410, %v687
      %v796 = vadd.f32 %v411, %v690
      %v797 = vadd.f32 %v412, %v695
      %v798 = vadd.f32 %v413, %v698
      %v799 = vadd.f32 %v414, %v703
      %v800 = vadd.f32 %v415, %v706
      %v801 = vadd.f32 %v416, %v711
      %v802 = vadd.f32 %v417, %v714
      %v803 = vadd.f32 %v418, %v719
      %v804 = vadd.f32 %v419, %v722
      %v805 = vadd.f32 %v420, %v727
      %v806 = vadd.f32 %v421, %v730
      %v807 = vadd.f32 %v422, %v735
      %v808 = vadd.f32 %v423, %v738
      %v809 = vadd.f32 %v424, %v743
      %v810 = vadd.f32 %v425, %v746
      %v811 = vadd.f32 %v426, %v751
      %v812 = vadd.f32 %v427, %v754
      %v813 = vadd.f32 %v428, %v759
      %v814 = vadd.f32 %v429, %v762
      %v815 = vadd.f32 %v430, %v767
      %v816 = vadd.f32 %v431, %v770
      %v817 = vadd.f32 %v432, %v775
      %v818 = vadd.f32 %v433, %v778
      %v819 = vadd.f32 %v434, %v783
      %v820 = vadd.f32 %v435, %v786
      %821 = vst [vmem:[#allocation2] sm:$0xff] %v789
      %822 = vst [vmem:[#allocation2 + $0x8] sm:$0xff] %v790
      %823 = vst [vmem:[#allocation2 + $0x10] sm:$0xff] %v791
      %824 = vst [vmem:[#allocation2 + $0x18] sm:$0xff] %v792
      %825 = vst [vmem:[#allocation2 + $0x20] sm:$0xff] %v793
      %826 = vst [vmem:[#allocation2 + $0x28] sm:$0xff] %v794
      %827 = vst [vmem:[#allocation2 + $0x30] sm:$0xff] %v795
      %828 = vst [vmem:[#allocation2 + $0x38] sm:$0xff] %v796
      %829 = vst [vmem:[#allocation2 + $0x40] sm:$0xff] %v797
      %830 = vst [vmem:[#allocation2 + $0x48] sm:$0xff] %v798
      %831 = vst [vmem:[#allocation2 + $0x50] sm:$0xff] %v799
      %832 = vst [vmem:[#allocation2 + $0x58] sm:$0xff] %v800
      %833 = vst [vmem:[#allocation2 + $0x60] sm:$0xff] %v801
      %834 = vst [vmem:[#allocation2 + $0x68] sm:$0xff] %v802
      %835 = vst [vmem:[#allocation2 + $0x70] sm:$0xff] %v803
      %836 = vst [vmem:[#allocation2 + $0x78] sm:$0xff] %v804
      %837 = vst [vmem:[#allocation2 + $0x80] sm:$0xff] %v805
      %838 = vst [vmem:[#allocation2 + $0x88] sm:$0xff] %v806
      %839 = vst [vmem:[#allocation2 + $0x90] sm:$0xff] %v807
      %840 = vst [vmem:[#allocation2 + $0x98] sm:$0xff] %v808
      %841 = vst [vmem:[#allocation2 + $0xa0] sm:$0xff] %v809
      %842 = vst [vmem:[#allocation2 + $0xa8] sm:$0xff] %v810
      %843 = vst [vmem:[#allocation2 + $0xb0] sm:$0xff] %v811
      %844 = vst [vmem:[#allocation2 + $0xb8] sm:$0xff] %v812
      %845 = vst [vmem:[#allocation2 + $0xc0] sm:$0xff] %v813
      %846 = vst [vmem:[#allocation2 + $0xc8] sm:$0xff] %v814
      %847 = vst [vmem:[#allocation2 + $0xd0] sm:$0xff] %v815
      %848 = vst [vmem:[#allocation2 + $0xd8] sm:$0xff] %v816
      %849 = vst [vmem:[#allocation2 + $0xe0] sm:$0xff] %v817
      %850 = vst [vmem:[#allocation2 + $0xe8] sm:$0xff] %v818
      %851 = vst [vmem:[#allocation2 + $0xf0] sm:$0xff] %v819
      %852 = vst [vmem:[#allocation2 + $0xf8] sm:$0xff] %v820
      // Predicated region
      $region41: #{batched_fused_matmul.1} parent=35 // pred_check
        %p853 = pneg %p368
      $region42: #{batched_fused_matmul.1} parent=35 // pred_check_branch
        %855 = sbr.rel (%p853) target = $region44
      $region43: #{batched_fused_matmul.1} parent=35 // pred_region
        %v856 = vld [vmem:[#allocation2] sm:$0xff]
        %v857 = vld [vmem:[#allocation2 + $0x8] sm:$0xff]
        %v858 = vld [vmem:[#allocation2 + $0x10] sm:$0xff]
        %v859 = vld [vmem:[#allocation2 + $0x18] sm:$0xff]
        %v860 = vld [vmem:[#allocation2 + $0x20] sm:$0xff]
        %v861 = vld [vmem:[#allocation2 + $0x28] sm:$0xff]
        %v862 = vld [vmem:[#allocation2 + $0x30] sm:$0xff]
        %v863 = vld [vmem:[#allocation2 + $0x38] sm:$0xff]
        %v864 = vld [vmem:[#allocation2 + $0x40] sm:$0xff]
        %v865 = vld [vmem:[#allocation2 + $0x48] sm:$0xff]
        %v866 = vld [vmem:[#allocation2 + $0x50] sm:$0xff]
        %v867 = vld [vmem:[#allocation2 + $0x58] sm:$0xff]
        %v868 = vld [vmem:[#allocation2 + $0x60] sm:$0xff]
        %v869 = vld [vmem:[#allocation2 + $0x68] sm:$0xff]
        %v870 = vld [vmem:[#allocation2 + $0x70] sm:$0xff]
        %v871 = vld [vmem:[#allocation2 + $0x78] sm:$0xff]
        %v872 = vld [vmem:[#allocation2 + $0x80] sm:$0xff]
        %v873 = vld [vmem:[#allocation2 + $0x88] sm:$0xff]
        %v874 = vld [vmem:[#allocation2 + $0x90] sm:$0xff]
        %v875 = vld [vmem:[#allocation2 + $0x98] sm:$0xff]
        %v876 = vld [vmem:[#allocation2 + $0xa0] sm:$0xff]
        %v877 = vld [vmem:[#allocation2 + $0xa8] sm:$0xff]
        %v878 = vld [vmem:[#allocation2 + $0xb0] sm:$0xff]
        %v879 = vld [vmem:[#allocation2 + $0xb8] sm:$0xff]
        %v880 = vld [vmem:[#allocation2 + $0xc0] sm:$0xff]
        %v881 = vld [vmem:[#allocation2 + $0xc8] sm:$0xff]
        %v882 = vld [vmem:[#allocation2 + $0xd0] sm:$0xff]
        %v883 = vld [vmem:[#allocation2 + $0xd8] sm:$0xff]
        %v884 = vld [vmem:[#allocation2 + $0xe0] sm:$0xff]
        %v885 = vld [vmem:[#allocation2 + $0xe8] sm:$0xff]
        %v886 = vld [vmem:[#allocation2 + $0xf0] sm:$0xff]
        %v887 = vld [vmem:[#allocation2 + $0xf8] sm:$0xff]
        %v888 = vld [vmem:[%s347] sm:$0x1]
        %v890 = vlaneseq
        %v891 = vshrl.u32 %v890, 7
        %v892 = vsub.s32 0, %v891
        %v893 = vrot.slane %v888, %v892
        %v895 = vmul.f32 %v856, %v893
        %v896 = vmul.f32 %v857, %v893
        %v897 = vmul.f32 %v858, %v893
        %v898 = vmul.f32 %v859, %v893
        %v899 = vmul.f32 %v860, %v893
        %v900 = vmul.f32 %v861, %v893
        %v901 = vmul.f32 %v862, %v893
        %v902 = vmul.f32 %v863, %v893
        %v903 = vmul.f32 %v864, %v893
        %v904 = vmul.f32 %v865, %v893
        %v905 = vmul.f32 %v866, %v893
        %v906 = vmul.f32 %v867, %v893
        %v907 = vmul.f32 %v868, %v893
        %v908 = vmul.f32 %v869, %v893
        %v909 = vmul.f32 %v870, %v893
        %v910 = vmul.f32 %v871, %v893
        %v911 = vmul.f32 %v872, %v893
        %v912 = vmul.f32 %v873, %v893
        %v913 = vmul.f32 %v874, %v893
        %v914 = vmul.f32 %v875, %v893
        %v915 = vmul.f32 %v876, %v893
        %v916 = vmul.f32 %v877, %v893
        %v917 = vmul.f32 %v878, %v893
        %v918 = vmul.f32 %v879, %v893
        %v919 = vmul.f32 %v880, %v893
        %v920 = vmul.f32 %v881, %v893
        %v921 = vmul.f32 %v882, %v893
        %v922 = vmul.f32 %v883, %v893
        %v923 = vmul.f32 %v884, %v893
        %v924 = vmul.f32 %v885, %v893
        %v925 = vmul.f32 %v886, %v893
        %v926 = vmul.f32 %v887, %v893
        %v927 = vld [vmem:[%s353] sm:$0x1]
        %v929 = vlaneseq
        %v930 = vshrl.u32 %v929, 7
        %v931 = vsub.s32 0, %v930
        %v932 = vrot.slane %v927, %v931
        %v934 = vadd.f32 %v895, %v932
        %v935 = vadd.f32 %v896, %v932
        %v936 = vadd.f32 %v897, %v932
        %v937 = vadd.f32 %v898, %v932
        %v938 = vadd.f32 %v899, %v932
        %v939 = vadd.f32 %v900, %v932
        %v940 = vadd.f32 %v901, %v932
        %v941 = vadd.f32 %v902, %v932
        %v942 = vadd.f32 %v903, %v932
        %v943 = vadd.f32 %v904, %v932
        %v944 = vadd.f32 %v905, %v932
        %v945 = vadd.f32 %v906, %v932
        %v946 = vadd.f32 %v907, %v932
        %v947 = vadd.f32 %v908, %v932
        %v948 = vadd.f32 %v909, %v932
        %v949 = vadd.f32 %v910, %v932
        %v950 = vadd.f32 %v911, %v932
        %v951 = vadd.f32 %v912, %v932
        %v952 = vadd.f32 %v913, %v932
        %v953 = vadd.f32 %v914, %v932
        %v954 = vadd.f32 %v915, %v932
        %v955 = vadd.f32 %v916, %v932
        %v956 = vadd.f32 %v917, %v932
        %v957 = vadd.f32 %v918, %v932
        %v958 = vadd.f32 %v919, %v932
        %v959 = vadd.f32 %v920, %v932
        %v960 = vadd.f32 %v921, %v932
        %v961 = vadd.f32 %v922, %v932
        %v962 = vadd.f32 %v923, %v932
        %v963 = vadd.f32 %v924, %v932
        %v964 = vadd.f32 %v925, %v932
        %v965 = vadd.f32 %v926, %v932
        %v966 = vpack.c.bf16 %v935, %v934
        %v967 = vpack.c.bf16 %v937, %v936
        %v968 = vpack.c.bf16 %v939, %v938
        %v969 = vpack.c.bf16 %v941, %v940
        %v970 = vpack.c.bf16 %v943, %v942
        %v971 = vpack.c.bf16 %v945, %v944
        %v972 = vpack.c.bf16 %v947, %v946
        %v973 = vpack.c.bf16 %v949, %v948
        %v974 = vpack.c.bf16 %v951, %v950
        %v975 = vpack.c.bf16 %v953, %v952
        %v976 = vpack.c.bf16 %v955, %v954
        %v977 = vpack.c.bf16 %v957, %v956
        %v978 = vpack.c.bf16 %v959, %v958
        %v979 = vpack.c.bf16 %v961, %v960
        %v980 = vpack.c.bf16 %v963, %v962
        %v981 = vpack.c.bf16 %v965, %v964
        %v998 = vunpack.c.l.b16 %v966
        %v999 = vunpack.c.h.b16 %v966
        %v1000 = vunpack.c.l.b16 %v967
        %v1001 = vunpack.c.h.b16 %v967
        %v1002 = vunpack.c.l.b16 %v968
        %v1003 = vunpack.c.h.b16 %v968
        %v1004 = vunpack.c.l.b16 %v969
        %v1005 = vunpack.c.h.b16 %v969
        %v1006 = vunpack.c.l.b16 %v970
        %v1007 = vunpack.c.h.b16 %v970
        %v1008 = vunpack.c.l.b16 %v971
        %v1009 = vunpack.c.h.b16 %v971
        %v1010 = vunpack.c.l.b16 %v972
        %v1011 = vunpack.c.h.b16 %v972
        %v1012 = vunpack.c.l.b16 %v973
        %v1013 = vunpack.c.h.b16 %v973
        %v1014 = vunpack.c.l.b16 %v974
        %v1015 = vunpack.c.h.b16 %v974
        %v1016 = vunpack.c.l.b16 %v975
        %v1017 = vunpack.c.h.b16 %v975
        %v1018 = vunpack.c.l.b16 %v976
        %v1019 = vunpack.c.h.b16 %v976
        %v1020 = vunpack.c.l.b16 %v977
        %v1021 = vunpack.c.h.b16 %v977
        %v1022 = vunpack.c.l.b16 %v978
        %v1023 = vunpack.c.h.b16 %v978
        %v1024 = vunpack.c.l.b16 %v979
        %v1025 = vunpack.c.h.b16 %v979
        %v1026 = vunpack.c.l.b16 %v980
        %v1027 = vunpack.c.h.b16 %v980
        %v1028 = vunpack.c.l.b16 %v981
        %v1029 = vunpack.c.h.b16 %v981
        %v1030 = vpack.c.b16 %v998, %v998
        %v1031 = vpack.c.b16 %v999, %v999
        %v1032 = vpack.c.b16 %v1000, %v1000
        %v1033 = vpack.c.b16 %v1001, %v1001
        %v1034 = vpack.c.b16 %v1002, %v1002
        %v1035 = vpack.c.b16 %v1003, %v1003
        %v1036 = vpack.c.b16 %v1004, %v1004
        %v1037 = vpack.c.b16 %v1005, %v1005
        %v1038 = vpack.c.b16 %v1006, %v1006
        %v1039 = vpack.c.b16 %v1007, %v1007
        %v1040 = vpack.c.b16 %v1008, %v1008
        %v1041 = vpack.c.b16 %v1009, %v1009
        %v1042 = vpack.c.b16 %v1010, %v1010
        %v1043 = vpack.c.b16 %v1011, %v1011
        %v1044 = vpack.c.b16 %v1012, %v1012
        %v1045 = vpack.c.b16 %v1013, %v1013
        %v1046 = vpack.c.b16 %v1014, %v1014
        %v1047 = vpack.c.b16 %v1015, %v1015
        %v1048 = vpack.c.b16 %v1016, %v1016
        %v1049 = vpack.c.b16 %v1017, %v1017
        %v1050 = vpack.c.b16 %v1018, %v1018
        %v1051 = vpack.c.b16 %v1019, %v1019
        %v1052 = vpack.c.b16 %v1020, %v1020
        %v1053 = vpack.c.b16 %v1021, %v1021
        %v1054 = vpack.c.b16 %v1022, %v1022
        %v1055 = vpack.c.b16 %v1023, %v1023
        %v1056 = vpack.c.b16 %v1024, %v1024
        %v1057 = vpack.c.b16 %v1025, %v1025
        %v1058 = vpack.c.b16 %v1026, %v1026
        %v1059 = vpack.c.b16 %v1027, %v1027
        %v1060 = vpack.c.b16 %v1028, %v1028
        %v1061 = vpack.c.b16 %v1029, %v1029
        %1094 = vst [vmem:[%s365] sm:$0xf] %v1030
        %1095 = vst [vmem:[%s365 + $0x4] sm:$0xf] %v1031
        %1096 = vst [vmem:[%s365 + $0x8] sm:$0xf] %v1032
        %1097 = vst [vmem:[%s365 + $0xc] sm:$0xf] %v1033
        %1098 = vst [vmem:[%s365 + $0x10] sm:$0xf] %v1034
        %1099 = vst [vmem:[%s365 + $0x14] sm:$0xf] %v1035
        %1100 = vst [vmem:[%s365 + $0x18] sm:$0xf] %v1036
        %1101 = vst [vmem:[%s365 + $0x1c] sm:$0xf] %v1037
        %1102 = vst [vmem:[%s365 + $0x20] sm:$0xf] %v1038
        %1103 = vst [vmem:[%s365 + $0x24] sm:$0xf] %v1039
        %1104 = vst [vmem:[%s365 + $0x28] sm:$0xf] %v1040
        %1105 = vst [vmem:[%s365 + $0x2c] sm:$0xf] %v1041
        %1106 = vst [vmem:[%s365 + $0x30] sm:$0xf] %v1042
        %1107 = vst [vmem:[%s365 + $0x34] sm:$0xf] %v1043
        %1108 = vst [vmem:[%s365 + $0x38] sm:$0xf] %v1044
        %1109 = vst [vmem:[%s365 + $0x3c] sm:$0xf] %v1045
        %1110 = vst [vmem:[%s365 + $0x40] sm:$0xf] %v1046
        %1111 = vst [vmem:[%s365 + $0x44] sm:$0xf] %v1047
        %1112 = vst [vmem:[%s365 + $0x48] sm:$0xf] %v1048
        %1113 = vst [vmem:[%s365 + $0x4c] sm:$0xf] %v1049
        %1114 = vst [vmem:[%s365 + $0x50] sm:$0xf] %v1050
        %1115 = vst [vmem:[%s365 + $0x54] sm:$0xf] %v1051
        %1116 = vst [vmem:[%s365 + $0x58] sm:$0xf] %v1052
        %1117 = vst [vmem:[%s365 + $0x5c] sm:$0xf] %v1053
        %1118 = vst [vmem:[%s365 + $0x60] sm:$0xf] %v1054
        %1119 = vst [vmem:[%s365 + $0x64] sm:$0xf] %v1055
        %1120 = vst [vmem:[%s365 + $0x68] sm:$0xf] %v1056
        %1121 = vst [vmem:[%s365 + $0x6c] sm:$0xf] %v1057
        %1122 = vst [vmem:[%s365 + $0x70] sm:$0xf] %v1058
        %1123 = vst [vmem:[%s365 + $0x74] sm:$0xf] %v1059
        %1124 = vst [vmem:[%s365 + $0x78] sm:$0xf] %v1060
        %1125 = vst [vmem:[%s365 + $0x7c] sm:$0xf] %v1061
      $region44: #{batched_fused_matmul.1} parent=35 // pred_fallthru
        _
      %s1126 = smul.u32 32, %s22
      %p1127 = scmp.lt.s32.totalorder %s21, 0
      %s1128 = scalar_select %p1127, %s21, 0
      %p1129 = scmp.lt.s32.totalorder %s1126, 255
      %s1130 = scalar_select %p1129, %s1126, 255
      %p1131 = scmp.lt.s32.totalorder %s23, 0
      %s1132 = scalar_select %p1131, %s23, 0
      %s1133 = sadd.s32 %s1132, %s1130
      %s1134 = smul.addr %s1128, 256
      %s1135 = sadd.s32 %s1133, %s1134
      %s1136 = smul.addr %s1135, 4
      %s1137 = scalar_lea.vmem %s4, %s1136
      // Predicated region
      $region45: #{batched_fused_matmul.1} parent=35 // pred_check
        %p1138 = pneg %p179
      $region46: #{batched_fused_matmul.1} parent=35 // pred_check_branch
        %1140 = sbr.rel (%p1138) target = $region48
      $region47: #{batched_fused_matmul.1} parent=35 // pred_region
        %s1141 = smul.u32 32, %s22
      $region48: #{batched_fused_matmul.1} parent=35 // pred_fallthru
        _
    $region36: #{batched_fused_matmul.1} parent=5 // pred_fallthru
      _
    %p1142 = scmp.le.s32.totalorder 2, %s10
    // Predicated region
    $region49: #{batched_fused_matmul.1} parent=5 // pred_check
      %p1143 = pneg %p1142
    $region50: #{batched_fused_matmul.1} parent=5 // pred_check_branch
      %1145 = sbr.rel (%p1143) target = $region52
    $region51: #{batched_fused_matmul.1} parent=5 // pred_region
      %s1146 = ssub.s32 %s10, 2
      // Predicated region
      $region53: #{batched_fused_matmul.1} parent=51 // pred_check
        %p1147 = pneg %p185
      $region54: #{batched_fused_matmul.1} parent=51 // pred_check_branch
        %1149 = sbr.rel (%p1147) target = $region56
      $region55: #{batched_fused_matmul.1} parent=51 // pred_region
        %s1150 = smul.u32 32, %s26
        %p1151 = scmp.lt.s32.totalorder %s25, 0
        %s1152 = scalar_select %p1151, %s25, 0
        %p1153 = scmp.lt.s32.totalorder %s1150, 255
        %s1154 = scalar_select %p1153, %s1150, 255
        %p1155 = scmp.lt.s32.totalorder %s27, 0
        %s1156 = scalar_select %p1155, %s27, 0
        %s1157 = sadd.s32 %s1156, %s1154
        %s1158 = smul.addr %s1152, 256
        %s1159 = sadd.s32 %s1157, %s1158
        %s1160 = smul.addr %s1159, 4
        %s1161 = scalar_lea.vmem %s4, %s1160
      $region56: #{batched_fused_matmul.1} parent=51 // pred_fallthru
        _
    $region52: #{batched_fused_matmul.1} parent=5 // pred_fallthru
      _
  $region6: #{batched_fused_matmul.1} parent=0 // loop_footer
    %s14 = sadd.s32 1, %s10
  $region7: #{batched_fused_matmul.1} parent=0 // loop_footer_branch
    %9 = sbr.rel target = $region3
  $region8: #{batched_fused_matmul.1} parent=0 // loop_exit
    _

</llo_original>
